<compile_context>
chip_gen: v7x
topology: tpu7x:2x2x1
jax: 0.10.0
libtpu: 0.0.40
codegen_flags: <defaults>
</compile_context>

<pallas_src>
import functools

import jax
import jax.numpy as jnp
from jax.experimental import pallas as pl
from jax.experimental.pallas import tpu as pltpu


def _round_up(x: int, m: int) -> int:
    return ((x + m - 1) // m) * m


_K_SINGLE_MAX = 2048            # up to this F the whole reduction is one dot
_K_TILE = 1024                  # K slab width for the large-F path
_X_TILE_BYTES = 4 * 1024 * 1024  # per-buffer X tile budget (double-buffered)


# --------------------------------------------------------------------------
# Kernels
# --------------------------------------------------------------------------

def _linear_single_k_kernel(x_ref, w_ref, b_ref, o_ref, *, apply_sigmoid):
    """grid = (batch_tiles,).  W^T and bias are full-array VMEM residents."""
    x = x_ref[...].astype(w_ref.dtype)        # in-kernel cast (VPU); X HBM stays at input dtype
    z = jnp.dot(x, w_ref[...], preferred_element_type=jnp.float32)
    z = z + b_ref[...]                         # f32 bias add
    if apply_sigmoid:
        z = 1.0 / (1.0 + jnp.exp(-z))          # exact sigmoid in f32 (EUP exp + divide)
    o_ref[...] = z.astype(o_ref.dtype)


def _linear_multi_k_kernel(x_ref, w_ref, b_ref, o_ref, acc_ref, *,
                           apply_sigmoid, tk):
    """grid = (batch_tiles, k_tiles).  W^T resident; K slab sliced in-kernel."""
    k = pl.program_id(1)

    @pl.when(k == 0)
    def _init():
        acc_ref[...] = jnp.zeros_like(acc_ref)

    k_off = pl.multiple_of(k * tk, tk)
    w_blk = w_ref[pl.ds(k_off, tk), :]
    x = x_ref[...].astype(w_blk.dtype)
    acc_ref[...] += jnp.dot(x, w_blk, preferred_element_type=jnp.float32)

    @pl.when(k == pl.num_programs(1) - 1)
    def _finalize():
        z = acc_ref[...] + b_ref[...]
        if apply_sigmoid:
            z = 1.0 / (1.0 + jnp.exp(-z))
        o_ref[...] = z.astype(o_ref.dtype)


# --------------------------------------------------------------------------
# pallas_call wrappers
# --------------------------------------------------------------------------

def _pick_batch_tile(B: int, F: int, x_itemsize: int) -> int:
    """Batch tile: <= ~4 MiB of X per buffer, sublane-aligned, >=2 tiles when big."""
    tb = _X_TILE_BYTES // max(1, F * x_itemsize)
    tb = max(8, min(tb, 1024))
    tb = (tb // 8) * 8
    if tb >= B:
        if B > 512:
            # expose two batch tiles so v7x's second TensorCore has work
            return _round_up(pl.cdiv(B, 2), 8)
        return B                                # single full-dim block (always legal)
    return tb                                   # tb < B  =>  >= 2 batch tiles


def _linear_call(x, w_t, b_row, *, apply_sigmoid, tb, tk):
    """x: [B, F(_pad)], w_t: [F_pad, C] (compute dtype), b_row: [1, C] f32."""
    B, F = x.shape
    F_w, C = w_t.shape
    out_shape = jax.ShapeDtypeStruct((B, C), jnp.float32)
    nb = pl.cdiv(B, tb)

    if tk is None:
        kernel = functools.partial(_linear_single_k_kernel,
                                   apply_sigmoid=apply_sigmoid)
        return pl.pallas_call(
            kernel,
            out_shape=out_shape,
            grid_spec=pltpu.PrefetchScalarGridSpec(
                num_scalar_prefetch=0,
                grid=(nb,),
                in_specs=[
                    pl.BlockSpec((tb, F), lambda i: (i, 0)),    # X batch tile (streamed)
                    pl.BlockSpec((F_w, C), lambda i: (0, 0)),   # W^T resident (DMA'd once)
                    pl.BlockSpec((1, C), lambda i: (0, 0)),     # bias resident
                ],
                out_specs=pl.BlockSpec((tb, C), lambda i: (i, 0)),
            ),
            compiler_params=pltpu.CompilerParams(
                dimension_semantics=("parallel",)),
        )(x, w_t, b_row)

    nk = F_w // tk
    kernel = functools.partial(_linear_multi_k_kernel,
                               apply_sigmoid=apply_sigmoid, tk=tk)
    return pl.pallas_call(
        kernel,
        out_shape=out_shape,
        grid_spec=pltpu.PrefetchScalarGridSpec(
            num_scalar_prefetch=0,
            grid=(nb, nk),
            in_specs=[
                pl.BlockSpec((tb, tk), lambda i, k: (i, k)),    # X (batch, K) tile
                pl.BlockSpec((F_w, C), lambda i, k: (0, 0)),    # W^T resident
                pl.BlockSpec((1, C), lambda i, k: (0, 0)),      # bias resident
            ],
            out_specs=pl.BlockSpec((tb, C), lambda i, k: (i, 0)),
            scratch_shapes=[pltpu.VMEM((tb, C), jnp.float32)],
        ),
        compiler_params=pltpu.CompilerParams(
            dimension_semantics=("parallel", "arbitrary")),
    )(x, w_t, b_row)


# --------------------------------------------------------------------------
# Classifier wrapper
# --------------------------------------------------------------------------

class PallasClassifier:
    """forward -> raw scores z; predict_proba -> sigmoid(z) (fused kernel)."""

    def __init__(self, weight, bias, compute_dtype=jnp.bfloat16):
        # weight: [num_classes, in_features] (PyTorch nn.Linear convention)
        # bias:   [num_classes]
        C, F = weight.shape
        self._C, self._F = C, F
        self._compute_dtype = compute_dtype

        if F <= _K_SINGLE_MAX:
            self._tk = None
            self._F_pad = F
        else:
            self._tk = _K_TILE
            self._F_pad = _round_up(F, self._tk)

        # Transpose + cast ONCE at init (no per-call W^T / cast pass).
        w_t = jnp.asarray(weight).T.astype(compute_dtype)     # [F, C]
        if self._F_pad != F:
            w_t = jnp.pad(w_t, ((0, self._F_pad - F), (0, 0)))
        self._w_t = w_t
        self._b_row = jnp.asarray(bias, jnp.float32).reshape(1, C)

    # -- helpers -----------------------------------------------------------
    def _prep_x(self, X):
        B, F = X.shape
        assert F == self._F
        x = jnp.asarray(X)
        if self._F_pad != F:        # only the (rare) large-F path pads features
            x = jnp.pad(x, ((0, 0), (0, self._F_pad - F)))
        tb = _pick_batch_tile(B, self._F_pad, x.dtype.itemsize)
        return x, tb

    # -- Classifier API ------------------------------------------------------
    def forward(self, X):
        x, tb = self._prep_x(X)
        z = _linear_call(x, self._w_t, self._b_row, apply_sigmoid=False,
                         tb=tb, tk=self._tk)
        assert z.shape[0] == X.shape[0]
        return z

    def predict_proba(self, X):
        x, tb = self._prep_x(X)
        return _linear_call(x, self._w_t, self._b_row, apply_sigmoid=True,
                            tb=tb, tk=self._tk)

    def predict_proba_scores(self, z):
        # Pure-JAX glue for scores computed elsewhere.
        return jax.nn.sigmoid(z)

    # TODO(synk): `_classify` is abstract (no concrete semantics) — not implemented.


# --------------------------------------------------------------------------
# Demo / self-test
# --------------------------------------------------------------------------

if __name__ == "__main__":
    key = jax.random.PRNGKey(0)
    kx, kw, kb = jax.random.split(key, 3)

    batch, in_features, num_classes = 8, 32, 4

    X = jax.random.normal(kx, (batch, in_features), dtype=jnp.float32)
    # Deterministic init mimicking nn.Linear's uniform(-1/sqrt(F), 1/sqrt(F)).
    bound = 1.0 / jnp.sqrt(jnp.float32(in_features))
    W = jax.random.uniform(kw, (num_classes, in_features),
                           minval=-bound, maxval=bound, dtype=jnp.float32)
    b = jax.random.uniform(kb, (num_classes,),
                           minval=-bound, maxval=bound, dtype=jnp.float32)

    z_ref = X @ W.T + b
    p_ref = jax.nn.sigmoid(z_ref)

    # Exact f32 compute path (tight tolerance).
    clf_f32 = PallasClassifier(W, b, compute_dtype=jnp.float32)
    z32 = clf_f32.forward(X)
    p32 = clf_f32.predict_proba(X)
    jax.block_until_ready((z32, p32))
    assert z32.shape == (batch, num_classes)
    assert p32.shape == (batch, num_classes)
    assert jnp.allclose(z32, z_ref, atol=1e-4), "forward (f32) mismatch"
    assert jnp.allclose(p32, p_ref, atol=1e-4), "predict_proba (f32) mismatch"

    # Default bf16-MXU path (looser tolerance from the bf16 cast only).
    clf = PallasClassifier(W, b)
    z = clf.forward(X)
    p = clf.predict_proba(X)
    jax.block_until_ready((z, p))
    assert z.shape == (batch, num_classes)
    assert p.shape == (batch, num_classes)
    assert jnp.allclose(z, z_ref, atol=2e-2), "forward (bf16) mismatch"
    assert jnp.allclose(p, p_ref, atol=1e-2), "predict_proba (bf16) mismatch"

    print("KERNEL_OK")
</pallas_src>

<mosaic_0001>
module attributes {stable_mosaic.version = 11 : i64} {
  func.func @_linear_single_k_kernel(%arg0: i32, %arg1: memref<8x32xf32, #tpu.memory_space<vmem>>, %arg2: memref<32x4xf32, #tpu.memory_space<vmem>>, %arg3: memref<1x4xf32, #tpu.memory_space<vmem>>, %arg4: memref<8x4xf32, #tpu.memory_space<vmem>>) attributes {dimension_semantics = [#tpu.dimension_semantics<parallel>], iteration_bounds = array<i64: 1>, scalar_prefetch = 0 : i64, scratch_operands = 0 : i64, tpu.core_type = #tpu.core_type<tc>, window_params = [{transform_indices = @transform_0, window_bounds = array<i64: 8, 32>}, {pipeline_mode = #tpu.pipeline_mode<synchronous>, transform_indices = @transform_1, window_bounds = array<i64: 32, 4>}, {pipeline_mode = #tpu.pipeline_mode<synchronous>, transform_indices = @transform_2, window_bounds = array<i64: 1, 4>}, {transform_indices = @transform_3, window_bounds = array<i64: 8, 4>}]} {
    %c0 = arith.constant 0 : index
    %c0_0 = arith.constant 0 : index
    %0 = vector.load %arg1[%c0, %c0_0] : memref<8x32xf32, #tpu.memory_space<vmem>>, vector<8x32xf32>
    %c0_1 = arith.constant 0 : index
    %c0_2 = arith.constant 0 : index
    %1 = vector.load %arg2[%c0_1, %c0_2] : memref<32x4xf32, #tpu.memory_space<vmem>>, vector<32x4xf32>
    %cst = arith.constant dense<0.000000e+00> : vector<8x4xf32>
    %2 = tpu.matmul %0, %1, %cst {dimension_numbers = #tpu.dot_dimension_numbers<[1], [0], [0], [1], [0, 0, 1, 1], [], []>} : vector<8x32xf32>, vector<32x4xf32>, vector<8x4xf32> -> vector<8x4xf32>
    %c0_3 = arith.constant 0 : index
    %c0_4 = arith.constant 0 : index
    %3 = vector.load %arg3[%c0_3, %c0_4] : memref<1x4xf32, #tpu.memory_space<vmem>>, vector<1x4xf32>
    %4 = vector.broadcast %3 : vector<1x4xf32> to vector<8x4xf32>
    %5 = arith.addf %2, %4 : vector<8x4xf32>
    %c0_5 = arith.constant 0 : index
    %c0_6 = arith.constant 0 : index
    %6 = vector.load %arg4[%c0_5, %c0_6] : memref<8x4xf32, #tpu.memory_space<vmem>>, vector<8x4xf32>
    tpu.vector_store %arg4[%c0_5, %c0_6], %5 {strides = array<i32>} : memref<8x4xf32, #tpu.memory_space<vmem>>, vector<8x4xf32>,
    return
  }
  func.func @transform_0(%arg0: i32) -> (i32, i32) {
    %c0_i32 = arith.constant 0 : i32
    %c0_i32_0 = arith.constant 0 : i32
    return %arg0, %c0_i32 : i32, i32
  }
  func.func @transform_1(%arg0: i32) -> (i32, i32) {
    %c0_i32 = arith.constant 0 : i32
    %c0_i32_0 = arith.constant 0 : i32
    %c0_i32_1 = arith.constant 0 : i32
    return %c0_i32, %c0_i32_0 : i32, i32
  }
  func.func @transform_2(%arg0: i32) -> (i32, i32) {
    %c0_i32 = arith.constant 0 : i32
    %c0_i32_0 = arith.constant 0 : i32
    %c0_i32_1 = arith.constant 0 : i32
    return %c0_i32, %c0_i32_0 : i32, i32
  }
  func.func @transform_3(%arg0: i32) -> (i32, i32) {
    %c0_i32 = arith.constant 0 : i32
    %c0_i32_0 = arith.constant 0 : i32
    return %arg0, %c0_i32 : i32, i32
  }
}

</mosaic_0001>

<llo_original>
// kernel: tpu_custom_call.1
$region0: #{tpu_custom_call.1}
  #allocation0 [shape = 'u32[]', space=smem, size = 0x4, offset = 0x4, fixed_abs, tag = 'smem constant byte address 0x4 - core index']
  #allocation1 [shape = 'u32[144,128]{1,0:T(1,128)}', space=vmem, size = 0x12000, scoped, tag = 'internal scratch']
  %s0 = inlined_call_operand.vmem [shape: f32[8,32], index: 0, kind: input, shape index: {}]
  %s1 = inlined_call_operand.vmem [shape: f32[32,4], index: 1, kind: input, shape index: {}]
  %s2 = inlined_call_operand.vmem [shape: f32[1,4], index: 2, kind: input, shape index: {}]
  %s3 = inlined_call_operand.vmem [shape: f32[8,4], index: 3, kind: output, shape index: {}]
  %s4 = sld [smem:[#allocation0]]
  $region22: #{tpu_custom_call.1} parent=0
    _
  %s6 = ssub.s32 1, %s4
  %s7 = scalar_select 0, %s6, %s4
  // Predicated region
  $region2: #{tpu_custom_call.1} parent=0 // pred_check
    _
  $region3: #{tpu_custom_call.1} parent=0 // pred_check_branch
    %9 = sbr.rel (0) target = $region5
  $region4: #{tpu_custom_call.1} parent=0 // pred_region
    _
  $region5: #{tpu_custom_call.1} parent=0 // pred_fallthru
    _
  // Predicated region
  $region6: #{tpu_custom_call.1} parent=0 // pred_check
    _
  $region7: #{tpu_custom_call.1} parent=0 // pred_check_branch
    %11 = sbr.rel (0) target = $region9
  $region8: #{tpu_custom_call.1} parent=0 // pred_region
    _
  $region9: #{tpu_custom_call.1} parent=0 // pred_fallthru
    _
  // Predicated region
  $region10: #{tpu_custom_call.1} parent=0 // pred_check
    _
  $region11: #{tpu_custom_call.1} parent=0 // pred_check_branch
    %13 = sbr.rel (0) target = $region13
  $region12: #{tpu_custom_call.1} parent=0 // pred_region
    _
  $region13: #{tpu_custom_call.1} parent=0 // pred_fallthru
    _
  %v14 = vld [vmem:[%s0] sm:$0xff]
  %v15 = vld [vmem:[%s1] sm:$0xff]
  %v16 = vld [vmem:[%s1 + $0x8] sm:$0xff]
  %v17 = vld [vmem:[%s1 + $0x10] sm:$0xff]
  %v18 = vld [vmem:[%s1 + $0x18] sm:$0xff]
  %v19 = vld [vmem:[%s2] sm:$0x1]
  %v21 = vlaneseq
  %v22 = vshrl.u32 %v21, 7
  %v23 = vsub.s32 0, %v22
  %v24 = vrot.slane %v19, %v23
  %vm26 = vcmask 261120
  %v28 = vsel %vm26, %v14, 0
  %30 = vmatprep.subr.mxu0 0.0
  %31 = vmatpush1.msra.mxu0 %v15
  %32 = vmatprep.subr.mxu0 0.0
  %33 = vmatpush1.msra.mxu0 %v16
  %34 = vmatprep.subr.mxu0 0.0
  %35 = vmatpush1.msra.mxu0 %v17
  %36 = vmatprep.subr.mxu0 0.0
  %37 = vmatpush1.msra.mxu0 %v18
  %38 = vmatprep.subr.mxu0 0.0
  %39 = vmatpush1.msra.mxu0 0.0
  %40 = vmatprep.subr.mxu0 0.0
  %41 = vmatpush1.msra.mxu0 0.0
  %42 = vmatprep.subr.mxu0 0.0
  %43 = vmatpush1.msra.mxu0 0.0
  %44 = vmatprep.subr.mxu0 0.0
  %45 = vmatpush1.msra.mxu0 0.0
  %46 = vmatprep.subr.mxu0 0.0
  %47 = vmatpush1.msra.mxu0 0.0
  %48 = vmatprep.subr.mxu0 0.0
  %49 = vmatpush1.msra.mxu0 0.0
  %50 = vmatprep.subr.mxu0 0.0
  %51 = vmatpush1.msra.mxu0 0.0
  %52 = vmatprep.subr.mxu0 0.0
  %53 = vmatpush1.msra.mxu0 0.0
  %54 = vmatprep.subr.mxu0 0.0
  %55 = vmatpush1.msra.mxu0 0.0
  %56 = vmatprep.subr.mxu0 0.0
  %57 = vmatpush1.msra.mxu0 0.0
  %58 = vmatprep.subr.mxu0 0.0
  %59 = vmatpush1.msra.mxu0 0.0
  %60 = vmatprep.subr.mxu0 0.0
  %61 = vmatpush1.msra.mxu0 0.0
  %62 = vmatprep.subr.mxu0 0.0
  %63 = vmatpush1.msra.mxu0 0.0
  %64 = vmatprep.subr.mxu0 0.0
  %65 = vmatpush1.msra.mxu0 0.0
  %66 = vmatprep.subr.mxu0 0.0
  %67 = vmatpush1.msra.mxu0 0.0
  %68 = vmatprep.subr.mxu0 0.0
  %69 = vmatpush1.msra.mxu0 0.0
  %70 = vmatprep.subr.mxu0 0.0
  %71 = vmatpush1.msra.mxu0 0.0
  %72 = vmatprep.subr.mxu0 0.0
  %73 = vmatpush1.msra.mxu0 0.0
  %74 = vmatprep.subr.mxu0 0.0
  %75 = vmatpush1.msra.mxu0 0.0
  %76 = vmatprep.subr.mxu0 0.0
  %77 = vmatpush1.msra.mxu0 0.0
  %78 = vmatprep.subr.mxu0 0.0
  %79 = vmatpush1.msra.mxu0 0.0
  %80 = vmatprep.subr.mxu0 0.0
  %81 = vmatpush1.msra.mxu0 0.0
  %82 = vmatprep.subr.mxu0 0.0
  %83 = vmatpush1.msra.mxu0 0.0
  %84 = vmatprep.subr.mxu0 0.0
  %85 = vmatpush1.msra.mxu0 0.0
  %86 = vmatprep.subr.mxu0 0.0
  %87 = vmatpush1.msra.mxu0 0.0
  %88 = vmatprep.subr.mxu0 0.0
  %89 = vmatpush1.msra.mxu0 0.0
  %90 = vmatprep.subr.mxu0 0.0
  %91 = vmatpush1.msra.mxu0 0.0
  %92 = vmatprep.subr.mxu0 0.0
  %93 = vmatpush1.msra.mxu0 0.0
  %94 = vmatprep.mubr.f32.mxu0 0.0
  %95 = vmatmul.mubr.f32.gmra.mrb[0].mxu0 %v28
  %v96 = vpop.f32.mrb[0].mxu0
  %v97 = vadd.f32 %v24, %v96
  %v98 = vpop.f32.mrb[0].mxu0
  %99 = vdwg.mxu0
  %vm100 = vcmask 31744
  %101 = vst.msk [vmem:[%s3] sm:$0xff] %vm100, %v97
  // Predicated region
  $region14: #{tpu_custom_call.1} parent=0 // pred_check
    _
  $region15: #{tpu_custom_call.1} parent=0 // pred_check_branch
    %103 = sbr.rel (0) target = $region17
  $region16: #{tpu_custom_call.1} parent=0 // pred_region
    _
  $region17: #{tpu_custom_call.1} parent=0 // pred_fallthru
    _
  // Predicated region
  $region18: #{tpu_custom_call.1} parent=0 // pred_check
    _
  $region19: #{tpu_custom_call.1} parent=0 // pred_check_branch
    %105 = sbr.rel (0) target = $region21
  $region20: #{tpu_custom_call.1} parent=0 // pred_region
    _
  $region21: #{tpu_custom_call.1} parent=0 // pred_fallthru
    _

</llo_original>
